<compile_context>
chip_gen: v7x
topology: tpu7x:2x2x1
jax: 0.10.0
libtpu: 0.0.40
codegen_flags: <defaults>
</compile_context>

<pallas_src>
import itertools

import numpy as np
import jax
import jax.numpy as jnp
from jax.experimental import pallas as pl
from jax.experimental.pallas import tpu as pltpu


# ------------------------- host-side unitary setup ------------------------- #

def _fock_basis(n, m):
    """Occupation-number tuples (s_1..s_m) with sum == n, lexicographic order."""
    # TODO(synk): the original `photon_unitary` basis ordering is unspecified;
    # we fix a deterministic lexicographic ordering of occupation tuples.
    return [s for s in itertools.product(range(n + 1), repeat=m) if sum(s) == n]


def phase_flip_fock_diag(n, m, mode1):
    """Diagonal of the Fock-basis unitary of a pi phase shifter on `mode1`.

    Mode-space PS = diag(1,...,exp(i*pi)=-1,...,1).  Its n-photon Fock lift is
    diagonal with entries prod_k PS_kk**s_k = (-1)**s[mode1]; the real part is
    a +/-1 diagonal, exactly what Phase_Flip_Fock_Unitary produces.
    """
    if n == 1:
        # Matches the PyTorch n==1 branch, which returns the m x m mode-space
        # unitary directly (-1 at index mode1).
        d = np.ones((m,), dtype=np.float32)
        d[mode1] = -1.0
        return d
    basis = _fock_basis(n, m)
    return np.array([(-1.0) ** s[mode1] for s in basis], dtype=np.float32)


# ------------------------------ Pallas kernel ------------------------------ #

def _ps_diag_mul_kernel(d_ref, x_ref, o_ref):
    # Broadcast sign multiply on the VPU: (R, 1) * (R, C) -> (R, C).
    o_ref[...] = d_ref[...] * x_ref[...]


def _round_up(x, k):
    return ((x + k - 1) // k) * k


_TILE_R = 512    # sublane-axis tile (multiple of 8/16/32 for f32/bf16/int8)
_TILE_C = 1024   # lane-axis tile (multiple of 128) -> lane-dense unmasked stores
_SMALL_FOOTPRINT_BYTES = 2 << 20   # above this, use the tiled (megacore) path


def ps_fock_unitary_apply(diag, matrix):
    """Computes U @ matrix where U = diag(diag) (+/-1 entries), as a Pallas kernel."""
    D, K = matrix.shape
    out_dtype = matrix.dtype
    # Multiplying by +/-1 is exact in any dtype; keep the input's native dtype.
    diag2d = diag.reshape(D, 1).astype(out_dtype)

    itemsize = jnp.dtype(out_dtype).itemsize
    sublane = max(8, 32 // itemsize)   # (8,128) f32 native tile; 16/32 for bf16/int8
    # Gridless-path VMEM footprint: matrix in + out, plus the (D,1) diag which
    # is lane-padded to 128 in VMEM (NOT D*itemsize).
    rows = _round_up(D, sublane)
    cols = _round_up(K, 128)
    footprint = (2 * rows * cols + rows * 128) * itemsize
    small = footprint <= _SMALL_FOOTPRINT_BYTES

    cost = pl.CostEstimate(flops=D * K, transcendentals=0,
                           bytes_accessed=(2 * D * K + D) * itemsize)

    if small:
        # Whole-array gridless path: no per-grid-step overhead for tiny problems.
        return pl.pallas_call(
            _ps_diag_mul_kernel,
            out_shape=jax.ShapeDtypeStruct((D, K), out_dtype),
            in_specs=[
                pl.BlockSpec(memory_space=pltpu.MemorySpace.VMEM),
                pl.BlockSpec(memory_space=pltpu.MemorySpace.VMEM),
            ],
            out_specs=pl.BlockSpec(memory_space=pltpu.MemorySpace.VMEM),
            input_output_aliases={1: 0},   # in-place sign flip when donated
            cost_estimate=cost,
        )(diag2d, matrix)

    # Tiled, megacore-parallel streaming path.  pl.cdiv grid: Pallas clips the
    # ragged boundary blocks and masks the edge stores, so no pad/slice passes
    # and no extra HBM traffic beyond the minimum read+write of the matrix.
    grid = (pl.cdiv(D, _TILE_R), pl.cdiv(K, _TILE_C))
    return pl.pallas_call(
        _ps_diag_mul_kernel,
        out_shape=jax.ShapeDtypeStruct((D, K), out_dtype),
        grid=grid,
        in_specs=[
            pl.BlockSpec((_TILE_R, 1), lambda i, j: (i, 0)),
            pl.BlockSpec((_TILE_R, _TILE_C), lambda i, j: (i, j)),
        ],
        out_specs=pl.BlockSpec((_TILE_R, _TILE_C), lambda i, j: (i, j)),
        input_output_aliases={1: 0},
        cost_estimate=cost,
        compiler_params=pltpu.CompilerParams(
            dimension_semantics=("parallel", "parallel"),
            # ~8.5 MiB f32 double-buffered working set; 32 MiB leaves headroom
            # on v5e/v6e (128 MiB physical) and v7x (64 MiB physical).
            vmem_limit_bytes=32 << 20,
        ),
    )(diag2d, matrix)


# --------------------------------- main ------------------------------------ #

if __name__ == "__main__":
    key = jax.random.PRNGKey(0)
    k1, k2 = jax.random.split(key)

    # --- Test 1: small Fock space -> gridless whole-array path ------------ #
    # n=2 photons, m=4 modes -> D = C(n+m-1, n) = 10; square "matrix" as in
    # the module's typical unitary-composition use.
    n, m, mode1 = 2, 4, 1
    diag_np = phase_flip_fock_diag(n, m, mode1)            # (10,) of +/-1
    D = diag_np.shape[0]
    diag = jnp.asarray(diag_np, dtype=jnp.float32)
    matrix = jax.random.normal(k1, (D, D), dtype=jnp.float32)

    # Reference == PyTorch self.Unitary.matmul(matrix) with U = diag(diag_np).
    ref = jnp.matmul(jnp.asarray(np.diag(diag_np), dtype=jnp.float32), matrix)
    out = jax.block_until_ready(ps_fock_unitary_apply(diag, matrix))
    np.testing.assert_allclose(np.asarray(out), np.asarray(ref),
                               rtol=1e-6, atol=1e-6)

    # --- Test 2: larger Fock space -> tiled path with ragged edge blocks -- #
    n2, m2, mode2 = 4, 7, 2
    diag2_np = phase_flip_fock_diag(n2, m2, mode2)         # (210,) of +/-1
    D2 = diag2_np.shape[0]
    K2 = 1500                                              # not multiples of (512, 1024)
    diag2 = jnp.asarray(diag2_np, dtype=jnp.float32)
    matrix2 = jax.random.normal(k2, (D2, K2), dtype=jnp.float32)

    ref2 = diag2[:, None] * matrix2                        # == diag(U) @ matrix2 exactly
    out2 = jax.block_until_ready(ps_fock_unitary_apply(diag2, matrix2))
    np.testing.assert_allclose(np.asarray(out2), np.asarray(ref2),
                               rtol=1e-6, atol=1e-6)

    print("KERNEL_OK")
</pallas_src>

<mosaic_0001>
module attributes {stable_mosaic.version = 11 : i64} {
  func.func @_ps_diag_mul_kernel(%arg0: memref<10x1xf32, #tpu.memory_space<vmem>>, %arg1: memref<10x10xf32, #tpu.memory_space<vmem>>, %arg2: memref<10x10xf32, #tpu.memory_space<vmem>>) attributes {dimension_semantics = [], scalar_prefetch = 0 : i64, scratch_operands = 0 : i64, tpu.core_type = #tpu.core_type<tc>} {
    %c0 = arith.constant 0 : index
    %c0_0 = arith.constant 0 : index
    %0 = vector.load %arg0[%c0, %c0_0] : memref<10x1xf32, #tpu.memory_space<vmem>>, vector<10x1xf32>
    %c0_1 = arith.constant 0 : index
    %c0_2 = arith.constant 0 : index
    %1 = vector.load %arg1[%c0_1, %c0_2] : memref<10x10xf32, #tpu.memory_space<vmem>>, vector<10x10xf32>
    %2 = vector.broadcast %0 : vector<10x1xf32> to vector<10x10xf32>
    %3 = arith.mulf %2, %1 : vector<10x10xf32>
    %c0_3 = arith.constant 0 : index
    %c0_4 = arith.constant 0 : index
    %4 = vector.load %arg2[%c0_3, %c0_4] : memref<10x10xf32, #tpu.memory_space<vmem>>, vector<10x10xf32>
    tpu.vector_store %arg2[%c0_3, %c0_4], %3 {strides = array<i32>} : memref<10x10xf32, #tpu.memory_space<vmem>>, vector<10x10xf32>,
    return
  }
}

</mosaic_0001>

<llo_original>
// kernel: tpu_custom_call.1
$region0: #{tpu_custom_call.1}
  #allocation0 [shape = 'u32[]', space=smem, size = 0x4, offset = 0x4, fixed_abs, tag = 'smem constant byte address 0x4 - core index']
  #allocation1 [shape = 'u32[144,128]{1,0:T(1,128)}', space=vmem, size = 0x12000, scoped, tag = 'internal scratch']
  %s0 = inlined_call_operand.vmem [shape: f32[10,1], index: 0, kind: input, shape index: {}]
  %s1 = inlined_call_operand.hbm [shape: f32[10,10], index: 1, kind: input, shape index: {}, may-alias: {1,2}]
  %s2 = inlined_call_operand.hbm [shape: f32[10,10], index: 2, kind: output, shape index: {}, may-alias: {1,2}]
  %s3 = sld [smem:[#allocation0]]
  $region22: #{tpu_custom_call.1} parent=0
    _
  %s5 = ssub.s32 1, %s3
  %s6 = scalar_select 0, %s5, %s3
  $region1: #{tpu_custom_call.1} parent=0
    #allocation2 [shape = 'u8[8192]{0}', space=vmem, size = 0x2000, scoped, tag = 'input window, operand 1, single buffered']
    #allocation3 [shape = 's32[1]{0}', space=sflag, size = 0x4, scoped, tag = 'scoped memory for tpu_custom_call.1']
    #allocation4 [shape = 's32[1]{0}', space=sflag, size = 0x4, scoped, tag = 'scoped memory for tpu_custom_call.1']
    #allocation5 [shape = 'u8[8192]{0}', space=vmem, size = 0x2000, scoped, tag = 'output window, operand 0, single buffered']
    %7 = vsyncpa [#allocation3], 0
    %8 = vsyncpa [#allocation4], 0
    // Predicated region
    $region2: #{tpu_custom_call.1} parent=1 // pred_check
      _
    $region3: #{tpu_custom_call.1} parent=1 // pred_check_branch
      %10 = sbr.rel (0) target = $region5
    $region4: #{tpu_custom_call.1} parent=1 // pred_region
      _
    $region5: #{tpu_custom_call.1} parent=1 // pred_fallthru
      _
    // Predicated region
    $region6: #{tpu_custom_call.1} parent=1 // pred_check
      _
    $region7: #{tpu_custom_call.1} parent=1 // pred_check_branch
      %12 = sbr.rel (0) target = $region9
    $region8: #{tpu_custom_call.1} parent=1 // pred_region
      %s14 = ssub.s32 256, 256
      %15 = vsyncadd [#allocation3], %s14
      %s16 = sshll.u32 [#allocation2], 4
      %s17 = int_to_ptr.vmem [resolvable:$true] %s16
      %22 = dma.hbm_to_vmem [thread:$0]  %s1, 256, %s17, [#allocation3], 128, 128, 8
    $region9: #{tpu_custom_call.1} parent=1 // pred_fallthru
      _
    // Predicated region
    $region10: #{tpu_custom_call.1} parent=1 // pred_check
      _
    $region11: #{tpu_custom_call.1} parent=1 // pred_check_branch
      %24 = sbr.rel (0) target = $region13
    $region12: #{tpu_custom_call.1} parent=1 // pred_region
      %25 = dma.done [#allocation3], 256
    $region13: #{tpu_custom_call.1} parent=1 // pred_fallthru
      _
    %v26 = vld [vmem:[%s0] sm:$0xff]
    %v27 = vld [vmem:[%s0 + $0x8] sm:$0x3]
    %v28 = vld [vmem:[#allocation2] sm:$0xff]
    %v29 = vld [vmem:[#allocation2 + $0x8] sm:$0x3]
    %31 = vset.pattern.permute.xlu0 0
    %32 = vperm.xlu0 %31, %v26
    %v33 = vpop.permute.xlu0 %32
    %36 = vset.pattern.permute.xlu0 0
    %37 = vperm.xlu0 %36, %v27
    %v38 = vpop.permute.xlu0 %37
    %v40 = vmul.f32 %v33, %v28
    %v41 = vmul.f32 %v38, %v29
    %vm42 = vcmask 80896
    %43 = vst.msk [vmem:[#allocation5] sm:$0xff] %vm42, %v40
    %vm44 = vcmask 74752
    %45 = vst.msk [vmem:[#allocation5 + $0x8] sm:$0x3] %vm44, %v41
    // Predicated region
    $region14: #{tpu_custom_call.1} parent=1 // pred_check
      _
    $region15: #{tpu_custom_call.1} parent=1 // pred_check_branch
      %47 = sbr.rel (0) target = $region17
    $region16: #{tpu_custom_call.1} parent=1 // pred_region
      %s49 = ssub.s32 256, 256
      %50 = vsyncadd [#allocation4], %s49
      %s51 = sshll.u32 [#allocation5], 4
      %s52 = int_to_ptr.vmem [resolvable:$true] %s51
      %57 = dma.vmem_to_hbm [thread:$0]  %s52, 256, %s2, [#allocation4], 128, 128, 8
    $region17: #{tpu_custom_call.1} parent=1 // pred_fallthru
      _
    // Predicated region
    $region18: #{tpu_custom_call.1} parent=1 // pred_check
      _
    $region19: #{tpu_custom_call.1} parent=1 // pred_check_branch
      %59 = sbr.rel (0) target = $region21
    $region20: #{tpu_custom_call.1} parent=1 // pred_region
      %60 = dma.done [#allocation4], 256
    $region21: #{tpu_custom_call.1} parent=1 // pred_fallthru
      _
    %61 = vsyncpa [#allocation3], 1
    %62 = vsyncpa [#allocation4], 1

</llo_original>
